<compile_context>
chip_gen: v5e
topology: v5e:2x2
jax: 0.10.0
libtpu: 0.0.40
codegen_flags: <defaults>
</compile_context>

<pallas_src>
import jax
import jax.numpy as jnp
from jax.experimental import pallas as pl
from jax.experimental.pallas import tpu as pltpu


def _round_up(x: int, m: int) -> int:
    return ((x + m - 1) // m) * m


def _word_groups_kernel(pos_ref, out_ref):
    # pos_ref: (TG, 1) int32 in VMEM -- sampled positions for this group tile
    #          (padded rows carry -1, which never matches any lane index).
    # out_ref: (TG, TS) in VMEM -- one-hot mask tile for grid cell (i, j).
    tg, ts = out_ref.shape
    lane = jax.lax.broadcasted_iota(jnp.int32, (tg, ts), 1)
    # Hoist the tile offset onto the (tg, 1) positions column rather than the
    # full (tg, ts) iota: scalar-width subtract instead of a full-tile add.
    pos = pos_ref[...] - pl.program_id(1) * ts
    out_ref[...] = (lane == pos).astype(out_ref.dtype)


def word_groups(seq_len: int, distinct: int, key, *, scaling: float = 1.5,
                dtype=jnp.int8, max_tg: int = 512, max_ts: int = 16384,
                block_bytes: int = 4 * 1024 * 1024, force_pallas: bool = False):
    """Returns (ngroups, seq_len) one-hot masks (dtype, default int8)."""
    max_groups = int(scaling * distinct)
    ngroups = min(max_groups, seq_len)
    if ngroups <= 0:
        return jnp.zeros((0, seq_len), dtype)

    itemsize = jnp.dtype(dtype).itemsize

    # Random permutation of positions, take first ngroups (glue, plain JAX).
    perm = jax.random.permutation(key, seq_len)[:ngroups].astype(jnp.int32)

    # Tiny problems: a fused XLA one-hot beats fixed pallas_call/grid cost.
    if (not force_pallas) and ngroups * seq_len * itemsize <= (1 << 20):
        lane = jnp.arange(seq_len, dtype=jnp.int32)[None, :]
        return (perm[:, None] == lane).astype(dtype)

    # --- Tile selection (HBM-writeback-bound; big, lane-dense, contiguous) ---
    g_round = _round_up(ngroups, 32)     # int8 rows pack 32 per sublane tile
    s_round = _round_up(seq_len, 128)    # lane-dense last dim

    # Prefer full padded sequence width per block (contiguous writeback DMA,
    # 1-D grid over group tiles), capped by max_ts and the VMEM budget.
    ts = min(s_round, _round_up(max_ts, 128))
    ts_budget = max(128, ((block_bytes // (32 * itemsize)) // 128) * 128)
    ts = min(ts, ts_budget)

    tg_budget = max(32, ((block_bytes // (ts * itemsize)) // 32) * 32)
    tg = min(g_round, _round_up(max_tg, 32), tg_budget)

    # If the whole problem is a single tile, split the group axis so both v7x
    # TensorCores get a "parallel" tile (one extra grid step elsewhere).
    if pl.cdiv(ngroups, tg) == 1 and pl.cdiv(seq_len, ts) == 1 and g_round >= 64:
        tg = _round_up((ngroups + 1) // 2, 32)

    grid = (pl.cdiv(ngroups, tg), pl.cdiv(seq_len, ts))

    # Positions padded to a whole number of group tiles; pad rows hold -1 so
    # they match no lane (their output rows are clipped anyway).
    g_pad = grid[0] * tg
    positions = jnp.full((g_pad, 1), -1, dtype=jnp.int32)
    positions = positions.at[:ngroups, 0].set(perm)

    cost = pl.CostEstimate(
        flops=ngroups * seq_len,
        transcendentals=0,
        bytes_accessed=ngroups * seq_len * itemsize + g_pad * 4,
    )

    return pl.pallas_call(
        _word_groups_kernel,
        out_shape=jax.ShapeDtypeStruct((ngroups, seq_len), dtype),
        grid=grid,
        in_specs=[pl.BlockSpec((tg, 1), lambda i, j: (i, 0))],
        out_specs=pl.BlockSpec((tg, ts), lambda i, j: (i, j)),
        compiler_params=pltpu.CompilerParams(
            dimension_semantics=("parallel", "parallel")),
        cost_estimate=cost,
    )(positions)


if __name__ == "__main__":
    key = jax.random.PRNGKey(0)

    # Small shapes consistent with the module: a "sentence" of 8 words,
    # distinct=4 -> max_groups = int(1.5*4) = 6 -> ngroups = min(6, 8) = 6.
    seq_len, distinct = 8, 4
    masks = jax.block_until_ready(
        word_groups(seq_len, distinct, key, force_pallas=True))

    ngroups = min(int(1.5 * distinct), seq_len)
    assert masks.shape == (ngroups, seq_len)
    assert masks.dtype == jnp.int8
    # each row is exactly one-hot
    assert bool(jnp.all(masks.sum(axis=-1, dtype=jnp.int32) == 1))
    # positions are distinct (they come from a permutation)
    chosen = jnp.argmax(masks, axis=-1)
    assert int(jnp.unique(chosen).shape[0]) == ngroups

    # Plain-JAX fast path (default dispatch at this size) must agree exactly.
    masks_fast = jax.block_until_ready(word_groups(seq_len, distinct, key))
    assert bool(jnp.array_equal(masks, masks_fast))

    # Also exercise the multi-block / ragged-edge path (small tiles force a
    # grid > 1x1 and non-multiple-of-tile output dims -> masked edge stores).
    key2 = jax.random.PRNGKey(1)
    seq_len2, distinct2 = 300, 100
    masks2 = jax.block_until_ready(
        word_groups(seq_len2, distinct2, key2, max_tg=32, max_ts=128,
                    force_pallas=True))
    ngroups2 = min(int(1.5 * distinct2), seq_len2)
    assert masks2.shape == (ngroups2, seq_len2)
    assert bool(jnp.all(masks2.sum(axis=-1, dtype=jnp.int32) == 1))
    chosen2 = jnp.argmax(masks2, axis=-1)
    assert int(jnp.unique(chosen2).shape[0]) == ngroups2

    print("KERNEL_OK")
</pallas_src>

<mosaic_0001>
module attributes {stable_mosaic.version = 11 : i64} {
  func.func @_word_groups_kernel(%arg0: i32, %arg1: i32, %arg2: memref<32x1xi32, #tpu.memory_space<vmem>>, %arg3: memref<32x128xi8, #tpu.memory_space<vmem>>) attributes {dimension_semantics = [#tpu.dimension_semantics<parallel>, #tpu.dimension_semantics<parallel>], iteration_bounds = array<i64: 1, 1>, scalar_prefetch = 0 : i64, scratch_operands = 0 : i64, tpu.core_type = #tpu.core_type<tc>, window_params = [{transform_indices = @transform_0, window_bounds = array<i64: 32, 1>}, {transform_indices = @transform_1, window_bounds = array<i64: 32, 128>}]} {
    %0 = tpu.iota {dimensions = array<i32: 1>} : vector<32x128xi32>
    %c0 = arith.constant 0 : index
    %c0_0 = arith.constant 0 : index
    %1 = vector.load %arg2[%c0, %c0_0] : memref<32x1xi32, #tpu.memory_space<vmem>>, vector<32x1xi32>
    %c128_i32 = arith.constant 128 : i32
    %2 = arith.muli %arg1, %c128_i32 : i32
    %3 = vector.broadcast %2 : i32 to vector<32x1xi32>
    %4 = arith.subi %1, %3 : vector<32x1xi32>
    %5 = vector.broadcast %4 : vector<32x1xi32> to vector<32x128xi32>
    %6 = arith.cmpi eq, %0, %5 : vector<32x128xi32>
    %7 = arith.extui %6 : vector<32x128xi1> to vector<32x128xi8>
    %c0_1 = arith.constant 0 : index
    %c0_2 = arith.constant 0 : index
    %8 = vector.load %arg3[%c0_1, %c0_2] : memref<32x128xi8, #tpu.memory_space<vmem>>, vector<32x128xi8>
    tpu.vector_store %arg3[%c0_1, %c0_2], %7 {strides = array<i32>} : memref<32x128xi8, #tpu.memory_space<vmem>>, vector<32x128xi8>,
    return
  }
  func.func @transform_0(%arg0: i32, %arg1: i32) -> (i32, i32) {
    %c0_i32 = arith.constant 0 : i32
    %c0_i32_0 = arith.constant 0 : i32
    return %arg0, %c0_i32 : i32, i32
  }
  func.func @transform_1(%arg0: i32, %arg1: i32) -> (i32, i32) {
    %c0_i32 = arith.constant 0 : i32
    return %arg0, %arg1 : i32, i32
  }
}

</mosaic_0001>

<llo_original>
// kernel: tpu_custom_call.1
$region0: #{tpu_custom_call.1}
  #allocation0 [shape = 'u32[]', space=smem, size = 0x4, offset = 0x4, fixed_abs, tag = 'smem constant byte address 0x4 - core index']
  #allocation1 [shape = 'u32[72,128]{1,0:T(1,128)}', space=vmem, size = 0x9000, scoped, tag = 'internal scratch']
  %s0 = inlined_call_operand.vmem [shape: s32[32,1], index: 0, kind: input, shape index: {}]
  %s1 = inlined_call_operand.hbm [shape: s8[6,8], index: 1, kind: output, shape index: {}]
  %s2 = sld [smem:[#allocation0]]
  $region14: #{tpu_custom_call.1} parent=0
    _
  %s4 = ssub.s32 1, %s2
  %s5 = scalar_select 0, %s4, %s2
  $region1: #{tpu_custom_call.1} parent=0
    #allocation2 [shape = 'u8[4096]{0}', space=vmem, size = 0x1000, scoped, tag = 'output window, operand 0, single buffered']
    #allocation3 [shape = 's32[1]{0}', space=sflag, size = 0x4, scoped, tag = 'scoped memory for tpu_custom_call.1']
    %6 = vsyncpa [#allocation3], 0
    // Predicated region
    $region2: #{tpu_custom_call.1} parent=1 // pred_check
      _
    $region3: #{tpu_custom_call.1} parent=1 // pred_check_branch
      %8 = sbr.rel (0) target = $region5
    $region4: #{tpu_custom_call.1} parent=1 // pred_region
      _
    $region5: #{tpu_custom_call.1} parent=1 // pred_fallthru
      _
    %v11 = vlaneseq
    %v12 = vand.u32 %v11, 127
    %v13 = vld [vmem:[%s0] sm:$0xff]
    %v14 = vld [vmem:[%s0 + $0x8] sm:$0xff]
    %v15 = vld [vmem:[%s0 + $0x10] sm:$0xff]
    %v16 = vld [vmem:[%s0 + $0x18] sm:$0xff]
    %s17 = smul.u32 0, 128
    %v18 = vstv %s17
    %v19 = vsub.s32 %v13, %v18
    %v20 = vsub.s32 %v14, %v18
    %v21 = vsub.s32 %v15, %v18
    %v22 = vsub.s32 %v16, %v18
    %23 = vset.pattern.permute.xlu0 0
    %24 = vperm.xlu0 %23, %v19
    %v25 = vpop.permute.xlu0 %24
    %26 = vset.pattern.permute.xlu0 0
    %27 = vperm.xlu0 %26, %v20
    %v28 = vpop.permute.xlu0 %27
    %29 = vset.pattern.permute.xlu0 0
    %30 = vperm.xlu0 %29, %v21
    %v31 = vpop.permute.xlu0 %30
    %32 = vset.pattern.permute.xlu0 0
    %33 = vperm.xlu0 %32, %v22
    %v34 = vpop.permute.xlu0 %33
    %vm35 = vcmp.eq.s32.totalorder %v12, %v25
    %vm36 = vcmp.eq.s32.totalorder %v12, %v28
    %vm37 = vcmp.eq.s32.totalorder %v12, %v31
    %vm38 = vcmp.eq.s32.totalorder %v12, %v34
    %vm39 = vmpackc.low %vm36, %vm35
    %vm40 = vmpackc.low %vm38, %vm37
    %v41 = vsel %vm39, 16711935, 0
    %v42 = vsel %vm40, 16711935, 0
    %v43 = vpack.c.b8 %v42, %v41
    %vm44 = vnez %v43
    %v45 = vsel %vm44, 16843009, 0
    %v46 = vunpack.c.0.s8 %v45
    %v47 = vunpack.c.1.s8 %v45
    %v48 = vunpack.c.2.s8 %v45
    %v49 = vunpack.c.3.s8 %v45
    %v50 = vpack.c.b16 %v46, %v46
    %v51 = vpack.c.b8 %v50, %v50
    %v52 = vpack.c.b16 %v47, %v47
    %v53 = vpack.c.b8 %v52, %v52
    %v54 = vpack.c.b16 %v48, %v48
    %v55 = vpack.c.b8 %v54, %v54
    %v56 = vpack.c.b16 %v49, %v49
    %v57 = vpack.c.b8 %v56, %v56
    %58 = vst [vmem:[#allocation2] sm:$0x3] %v51
    %59 = vst [vmem:[#allocation2 + $0x2] sm:$0x3] %v53
    %60 = vst [vmem:[#allocation2 + $0x4] sm:$0x3] %v55
    %61 = vst [vmem:[#allocation2 + $0x6] sm:$0x3] %v57
    // Predicated region
    $region6: #{tpu_custom_call.1} parent=1 // pred_check
      _
    $region7: #{tpu_custom_call.1} parent=1 // pred_check_branch
      %63 = sbr.rel (0) target = $region9
    $region8: #{tpu_custom_call.1} parent=1 // pred_region
      %65 = vsyncadd [#allocation3], 96
      %s66 = sshll.u32 [#allocation2], 4
      %s67 = int_to_ptr.vmem [resolvable:$true] %s66
      %s68 = sshll.u32 %s1, 4
      %s69 = int_to_ptr.hbm [resolvable:$true] %s68
      %74 = dma.vmem_to_hbm [thread:$0]  %s67, 32, %s69, [#allocation3], 32, 32, 2
    $region9: #{tpu_custom_call.1} parent=1 // pred_fallthru
      _
    // Predicated region
    $region10: #{tpu_custom_call.1} parent=1 // pred_check
      _
    $region11: #{tpu_custom_call.1} parent=1 // pred_check_branch
      %76 = sbr.rel (0) target = $region13
    $region12: #{tpu_custom_call.1} parent=1 // pred_region
      %78 = dma.done [#allocation3], 128
    $region13: #{tpu_custom_call.1} parent=1 // pred_fallthru
      _
    %79 = vsyncpa [#allocation3], 1

</llo_original>
